<compile_context>
chip_gen: v7x
topology: tpu7x:2x2x1
jax: 0.10.0
libtpu: 0.0.40
codegen_flags: <defaults>
</compile_context>

<pallas_src>
import functools
import math
import random

import jax
import jax.numpy as jnp
from jax.experimental import pallas as pl
from jax.experimental.pallas import tpu as pltpu


# Keep x fully VMEM-resident (fetched once) when it is at most this big.
# Double-buffered by the pipeline, so the real footprint is ~2x this.
_X_RESIDENT_BYTES = 4 * 1024 * 1024


# ---------------------------------------------------------------------------
# Kernel
# ---------------------------------------------------------------------------
def _masked_matmul_kernel(x_ref, wt_ref, o_ref, *, tk, x_resident):
    """One (n, k) grid step of  y = x @ wt  with K as the innermost reduction."""
    # Zero the resident f32 output block at the start of the K reduction.
    @pl.when(pl.program_id(1) == 0)
    def _():
        o_ref[...] = jnp.zeros_like(o_ref)

    if x_resident:
        # x lives fully in VMEM (its block index is constant across the grid),
        # so slice out the current K chunk instead of re-streaming from HBM.
        k0 = pl.multiple_of(pl.program_id(1) * tk, tk)
        x_blk = x_ref[:, pl.ds(k0, tk)]
    else:
        x_blk = x_ref[...]

    # bf16 x bf16 on the MXU, f32 accumulation straight into the resident
    # f32 output block (exact across the K loop; no scratch needed).
    o_ref[...] += jnp.dot(x_blk, wt_ref[...], preferred_element_type=jnp.float32)


# ---------------------------------------------------------------------------
# Tiling helpers
# ---------------------------------------------------------------------------
def _pick_tile(dim, target, granule):
    """Largest multiple of `granule` that divides `dim` and is <= target.

    Falls back to the full dimension (always a legal block shape), so
    non-divisible shapes never produce masked edge tiles.
    """
    if dim <= target:
        return dim
    t = (min(target, dim) // granule) * granule
    while t >= granule:
        if dim % t == 0:
            return t
        t -= granule
    return dim


def _default_tiles(K, N):
    # ~2 MiB bf16 weight tiles (tk x tn): big enough to amortize the ~0.35 us
    # per-step overhead on v5e/v6e and to keep the ~3.2 TB/s v7x HBM busy,
    # small enough (2x double-buffered = 4 MiB) for v7x's 64 MiB VMEM.
    tn = _pick_tile(N, 512, 128)
    # Keep >= 2 N-tiles when possible so the 'parallel' grid axis can be
    # split across the 2 TensorCores per chip on v7x.
    if N // tn < 2 and N >= 256:
        tn = _pick_tile(N, N // 2, 128)
    tk = _pick_tile(K, 2048, 128)
    return tn, tk


# ---------------------------------------------------------------------------
# pallas_call wrapper
# ---------------------------------------------------------------------------
def _masked_matmul(x, wt, *, tn, tk):
    """y = x @ wt, wt = (W*M).T pre-folded / pre-transposed / pre-cast."""
    B, K = x.shape
    K2, N = wt.shape
    assert K == K2
    assert N % tn == 0 and K % tk == 0  # guaranteed by _pick_tile

    grid = (N // tn, K // tk)  # reduction axis (K) innermost

    x_itemsize = jnp.dtype(x.dtype).itemsize
    wt_itemsize = jnp.dtype(wt.dtype).itemsize

    x_resident = B * K * x_itemsize <= _X_RESIDENT_BYTES
    if x_resident:
        x_spec = pl.BlockSpec((B, K), lambda n, k: (0, 0))  # fetched once
        x_bytes = B * K * x_itemsize
    else:
        x_spec = pl.BlockSpec((B, tk), lambda n, k: (0, k))
        x_bytes = grid[0] * B * K * x_itemsize  # re-streamed once per N tile
        # TODO(synk): for very large B, add a leading 'parallel' B grid axis
        # and pad B to MXU row granularity (128/256) once MXU-bound.

    cost = pl.CostEstimate(
        flops=2 * B * N * K,
        transcendentals=0,
        bytes_accessed=x_bytes + K * N * wt_itemsize + B * N * 4,
    )

    kernel = functools.partial(_masked_matmul_kernel, tk=tk, x_resident=x_resident)

    return pl.pallas_call(
        kernel,
        out_shape=jax.ShapeDtypeStruct((B, N), jnp.float32),
        grid=grid,
        in_specs=[
            x_spec,
            # (W*M).T in (K, N) layout: contraction on the sublane axis, so the
            # tile feeds the MXU with no in-kernel transpose.
            pl.BlockSpec((tk, tn), lambda n, k: (k, n)),
        ],
        # Output block index ignores k -> resident f32 accumulator across K.
        out_specs=pl.BlockSpec((B, tn), lambda n, k: (0, n)),
        compiler_params=pltpu.CompilerParams(
            dimension_semantics=("parallel", "arbitrary"),
            vmem_limit_bytes=32 * 1024 * 1024,
        ),
        cost_estimate=cost,
    )(x, wt)


# ---------------------------------------------------------------------------
# Public API
# ---------------------------------------------------------------------------
def prepare_masked_weight(weights, masks, compute_dtype=jnp.bfloat16):
    """One-time parameter plumbing: (W * M).T cast to the compute dtype.

    The mask is frozen (requires_grad=False) and PyTorch's forward masks the
    weight in place, so folding once at init is exact. Call this ONCE and pass
    the result to sparse_linear_apply on every forward call.
    """
    assert masks.shape == weights.shape
    # TODO(synk): for more bandwidth, quantize to fp8 on v7x (no int MXU path
    # there) and int8 on v5e/v6e.
    return (weights * masks).T.astype(compute_dtype)  # (K, N)


def sparse_linear_apply(x, wt, *, tn=None, tk=None, force_pallas=False):
    """Hot path: y = x @ wt with wt the pre-folded (K, N) masked weight (f32 out)."""
    B, K = x.shape
    K2, N = wt.shape
    assert K == K2

    # Tiny cast (B*K elements); the weight stream is the HBM-bound part.
    x = x.astype(wt.dtype)

    dn, dk = _default_tiles(K, N)
    tn = dn if tn is None else _pick_tile(N, tn, 128)
    tk = dk if tk is None else _pick_tile(K, tk, 128)

    # Size gate: at grid (1,1) there is no pipelining to exploit and the fixed
    # pallas_call + per-step overhead dominates; plain XLA dot matches or wins.
    if not force_pallas and (N // tn) * (K // tk) == 1:
        return jnp.dot(x, wt, preferred_element_type=jnp.float32)

    return _masked_matmul(x, wt, tn=tn, tk=tk)


def sparse_linear(x, weights, masks, **kw):
    """Convenience one-shot (re-folds the mask every call; prefer prepare+apply)."""
    return sparse_linear_apply(x, prepare_masked_weight(weights, masks), **kw)


def make_params(num_inputs, num_outputs, sparsity, key):
    """Deterministic xavier-normal weights + random {0,1} mask (as in __init__)."""
    # xavier_normal: std = sqrt(2 / (fan_in + fan_out))
    std = math.sqrt(2.0 / (num_inputs + num_outputs))
    weights = std * jax.random.normal(key, (num_outputs, num_inputs), jnp.float32)

    # randomarraygenerator: pick int((1 - sparsity/100) * mask_els) indices and
    # set them to 1.  Mirrors the reference's `range(0, mask_els - 1)` exactly
    # (including its off-by-one: the last flat index is never kept).
    mask_els = num_outputs * num_inputs
    num_kept = int((1.0 - sparsity / 100.0) * mask_els)
    rng = random.Random(0)  # deterministic in-script replacement for `random.sample`
    keep_idx = rng.sample(range(0, mask_els - 1), num_kept)
    masks_flat = jnp.zeros((mask_els,), jnp.float32)
    masks_flat = masks_flat.at[jnp.asarray(keep_idx, dtype=jnp.int32)].set(1.0)
    masks = masks_flat.reshape(num_outputs, num_inputs)
    return weights, masks


if __name__ == "__main__":
    # Small shapes consistent with the module: x:(B, num_inputs) -> y:(B, num_outputs)
    B, num_inputs, num_outputs, sparsity = 8, 512, 256, 50

    key = jax.random.PRNGKey(0)
    kx, kw = jax.random.split(key)
    x = jax.random.normal(kx, (B, num_inputs), jnp.float32)
    weights, masks = make_params(num_inputs, num_outputs, sparsity, kw)

    # One-time prep (mask is frozen): fold + transpose + bf16 cast, done ONCE.
    wt = jax.block_until_ready(prepare_masked_weight(weights, masks))  # (K, N) bf16

    # (a) explicit small tiles -> grid (2, 4): exercises the resident-output
    #     K reduction and both grid axes of the Pallas kernel.
    y_a = jax.block_until_ready(sparse_linear_apply(x, wt, tn=128, tk=128))
    # (b) default auto-tiled Pallas path (grid (2, 1) at these shapes).
    y_b = jax.block_until_ready(sparse_linear_apply(x, wt))
    # (c) size-gated tiny problem -> plain jnp.dot fallback.
    y_c = jax.block_until_ready(sparse_linear_apply(x[:, :128], wt[:128, :128]))

    # Reference of what the kernel computes (bf16 operands, f32 accumulation).
    x_bf = x.astype(jnp.bfloat16)
    y_match = jnp.dot(x_bf, wt, preferred_element_type=jnp.float32)
    # Exact f32 forward semantics of the module: x @ (W*M).T
    y_true = x @ (weights * masks).T

    assert y_a.shape == (B, num_outputs) and y_a.dtype == jnp.float32
    assert jnp.allclose(y_a, y_match, atol=1e-4, rtol=1e-4), "kernel != bf16 ref (a)"
    assert jnp.allclose(y_b, y_match, atol=1e-4, rtol=1e-4), "kernel != bf16 ref (b)"
    assert jnp.allclose(y_a, y_true, atol=3e-2, rtol=3e-2), "kernel != f32 truth"
    y_c_ref = jnp.dot(x_bf[:, :128], wt[:128, :128], preferred_element_type=jnp.float32)
    assert jnp.allclose(y_c, y_c_ref, atol=1e-4, rtol=1e-4), "gated path mismatch"

    print("KERNEL_OK")
</pallas_src>

<mosaic_0001>
module attributes {stable_mosaic.version = 11 : i64} {
  func.func @_masked_matmul_kernel(%arg0: i32, %arg1: i32, %arg2: memref<8x512xbf16, #tpu.memory_space<vmem>>, %arg3: memref<128x128xbf16, #tpu.memory_space<vmem>>, %arg4: memref<8x128xf32, #tpu.memory_space<vmem>>) attributes {dimension_semantics = [#tpu.dimension_semantics<parallel>, #tpu.dimension_semantics<arbitrary>], iteration_bounds = array<i64: 2, 4>, scalar_prefetch = 0 : i64, scratch_operands = 0 : i64, tpu.core_type = #tpu.core_type<tc>, window_params = [{pipeline_mode = #tpu.pipeline_mode<synchronous>, transform_indices = @transform_0, window_bounds = array<i64: 8, 512>}, {transform_indices = @transform_1, window_bounds = array<i64: 128, 128>}, {transform_indices = @transform_2, window_bounds = array<i64: 8, 128>}]} {
    %c0_i32 = arith.constant 0 : i32
    %0 = arith.cmpi eq, %arg1, %c0_i32 : i32
    %1 = arith.extui %0 : i1 to i32
    %c0_i32_0 = arith.constant 0 : i32
    %2 = arith.cmpi ne, %1, %c0_i32_0 : i32
    scf.if %2 {
      %cst_7 = arith.constant 0.000000e+00 : f32
      %12 = vector.broadcast %cst_7 : f32 to vector<8x128xf32>
      %c0_8 = arith.constant 0 : index
      %c0_9 = arith.constant 0 : index
      %13 = vector.load %arg4[%c0_8, %c0_9] : memref<8x128xf32, #tpu.memory_space<vmem>>, vector<8x128xf32>
      tpu.vector_store %arg4[%c0_8, %c0_9], %12 {strides = array<i32>} : memref<8x128xf32, #tpu.memory_space<vmem>>, vector<8x128xf32>,
    } else {
    }
    %c128_i32 = arith.constant 128 : i32
    %3 = arith.muli %arg1, %c128_i32 : i32
    %4 = tpu.assume_multiple %3, 128 : i32
    %c0 = arith.constant 0 : index
    %5 = arith.index_cast %4 : i32 to index
    %6 = vector.load %arg2[%c0, %5] : memref<8x512xbf16, #tpu.memory_space<vmem>>, vector<8x128xbf16>
    %c0_1 = arith.constant 0 : index
    %c0_2 = arith.constant 0 : index
    %7 = vector.load %arg4[%c0_1, %c0_2] : memref<8x128xf32, #tpu.memory_space<vmem>>, vector<8x128xf32>
    %c0_3 = arith.constant 0 : index
    %c0_4 = arith.constant 0 : index
    %8 = vector.load %arg3[%c0_3, %c0_4] : memref<128x128xbf16, #tpu.memory_space<vmem>>, vector<128x128xbf16>
    %cst = arith.constant dense<0.000000e+00> : vector<8x128xf32>
    %9 = tpu.matmul %6, %8, %cst {dimension_numbers = #tpu.dot_dimension_numbers<[1], [0], [0], [1], [0, 0, 1, 1], [], []>} : vector<8x128xbf16>, vector<128x128xbf16>, vector<8x128xf32> -> vector<8x128xf32>
    %10 = arith.addf %7, %9 : vector<8x128xf32>
    %c0_5 = arith.constant 0 : index
    %c0_6 = arith.constant 0 : index
    %11 = vector.load %arg4[%c0_5, %c0_6] : memref<8x128xf32, #tpu.memory_space<vmem>>, vector<8x128xf32>
    tpu.vector_store %arg4[%c0_5, %c0_6], %10 {strides = array<i32>} : memref<8x128xf32, #tpu.memory_space<vmem>>, vector<8x128xf32>,
    return
  }
  func.func @transform_0(%arg0: i32, %arg1: i32) -> (i32, i32) {
    %c0_i32 = arith.constant 0 : i32
    %c0_i32_0 = arith.constant 0 : i32
    %c0_i32_1 = arith.constant 0 : i32
    return %c0_i32, %c0_i32_0 : i32, i32
  }
  func.func @transform_1(%arg0: i32, %arg1: i32) -> (i32, i32) {
    %c0_i32 = arith.constant 0 : i32
    return %arg1, %arg0 : i32, i32
  }
  func.func @transform_2(%arg0: i32, %arg1: i32) -> (i32, i32) {
    %c0_i32 = arith.constant 0 : i32
    %c0_i32_0 = arith.constant 0 : i32
    return %c0_i32, %arg0 : i32, i32
  }
}

</mosaic_0001>

<llo_original>
// kernel: tpu_custom_call.1
$region0: #{tpu_custom_call.1}
  #allocation0 [shape = 'u32[]', space=smem, size = 0x4, offset = 0x4, fixed_abs, tag = 'smem constant byte address 0x4 - core index']
  #allocation1 [shape = 'u32[144,128]{1,0:T(1,128)}', space=vmem, size = 0x12000, scoped, tag = 'internal scratch']
  %s0 = inlined_call_operand.hbm [shape: bf16[8,512], index: 0, kind: input, shape index: {}]
  %s1 = inlined_call_operand.hbm [shape: bf16[512,256], index: 1, kind: input, shape index: {}]
  %s2 = inlined_call_operand.hbm [shape: f32[8,256], index: 2, kind: output, shape index: {}]
  %s3 = sld [smem:[#allocation0]]
  $region53: #{tpu_custom_call.1} parent=0
    _
  %s5 = ssub.s32 1, %s3
  %s6 = scalar_select 0, %s5, %s3
  $region1: #{tpu_custom_call.1} parent=0
    #allocation2 [shape = 'u8[8192]{0}', space=vmem, size = 0x2000, scoped, tag = 'input window, operand 0, single buffered']
    #allocation3 [shape = 's32[2]{0}', space=sflag, size = 0x8, scoped, tag = 'scoped memory for tpu_custom_call.1']
    #allocation4 [shape = 's32[2]{0}', space=sflag, size = 0x8, scoped, tag = 'scoped memory for tpu_custom_call.1']
    #allocation5 [shape = 'u8[65536]{0}', space=vmem, size = 0x10000, scoped, tag = 'input window, operand 1']
    #allocation6 [shape = 's32[2]{0}', space=sflag, size = 0x8, scoped, tag = 'scoped memory for tpu_custom_call.1']
    #allocation7 [shape = 'u8[8192]{0}', space=vmem, size = 0x2000, scoped, tag = 'output window, operand 0']
    %7 = vsyncpa [#allocation3], 0
    %8 = vsyncpa [#allocation6], 0
    %s9 = scalar_lea.sflag [#allocation6], 1
    %10 = vsyncpa %s9, 0
    %11 = vsyncpa [#allocation4], 0
    %s12 = scalar_lea.sflag [#allocation4], 1
    %13 = vsyncpa %s12, 0
    loop: start=0, step=1, limit=10
    $region2: #{tpu_custom_call.1} parent=1 // loop_pre_header
      _
    $region3: #{tpu_custom_call.1} parent=1 // loop_header
      %s15 = sphi 0, %s19
      %p16 = scmp.ge.s32.totalorder %s15, 10
      %s22 = sphi 0, %s34
      %s23 = sphi 0, %s30
      %s24 = sphi 0, %s22
      %s25 = sphi 0, %s23
      %s26 = sphi 0, %s24
      %s27 = sphi 0, %s25
      %s35 = sphi 0, %s35
      %s37 = sphi 0, %s35
      %s38 = sphi 0, %s37
      %s52 = sphi 0, %s38
      %s60 = sphi 0, %s62
      %s63 = sphi 0, %s60
      %s64 = sphi 0, %s63
      %s80 = sphi 0, %s64
      %s86 = sphi 0, %s88
      %s89 = sphi 0, %s86
      %s90 = sphi 0, %s89
      %s106 = sphi 0, %s90
    $region4: #{tpu_custom_call.1} parent=1 // loop_header_branch
      %18 = sbr.rel (%p16) target = $region8
    $region5: #{tpu_custom_call.1} parent=1 // loop_body
      %s20 = ssub.s32 %s15, 1
      %s21 = ssub.s32 %s15, 2
      %s28 = sadd.s32 1, %s23
      %p29 = scmp.ge.s32.totalorder %s28, 4
      %s30 = scalar_select %p29, 0, %s28
      %s31 = sadd.s32 1, %s22
      %s32 = scalar_select %p29, %s31, %s22
      %p33 = scmp.ge.s32.totalorder %s32, 2
      %s34 = scalar_select %p33, 0, %s32
      %s36 = sadd.s32 %s35, 1
      %p39 = scmp.eq.s32.totalorder %s15, 7
      %p40 = scmp.ne.s32.totalorder %s35, %s37
      %p41 = scmp.eq.s32.totalorder %s15, 0
      %p42 = por %p40, %p41
      %p43 = scmp.ne.s32.totalorder %s35, %s37
      %p44 = scmp.eq.s32.totalorder %s20, 7
      %p45 = por %p43, %p44
      %p46 = scmp.ne.s32.totalorder %s37, %s38
      %p47 = scmp.eq.s32.totalorder %s20, 0
      %p48 = por %p46, %p47
      %p49 = scmp.ne.s32.totalorder %s37, %s38
      %p50 = scmp.eq.s32.totalorder %s21, 7
      %p51 = por %p49, %p50
      %p53 = scmp.ne.s32.totalorder %s38, %s52
      %p54 = scmp.eq.s32.totalorder %s21, 0
      %p55 = por %p53, %p54
      %s56 = ssub.s32 %s23, %s30
      %s57 = ssub.s32 %s22, %s34
      %s58 = sor.u32 %s56, %s57
      %p59 = scmp.eq.s32.totalorder %s58, 0
      %s61 = sadd.s32 %s60, 1
      %s62 = scalar_select %p59, %s60, %s61
      %p65 = pneg %p59
      %p66 = scmp.eq.s32.totalorder %s15, 7
      %p67 = por %p65, %p66
      %p68 = scmp.ne.s32.totalorder %s60, %s63
      %p69 = scmp.eq.s32.totalorder %s15, 0
      %p70 = por %p68, %p69
      %p71 = scmp.ne.s32.totalorder %s60, %s63
      %p72 = scmp.eq.s32.totalorder %s20, 7
      %p73 = por %p71, %p72
      %p74 = scmp.ne.s32.totalorder %s63, %s64
      %p75 = scmp.eq.s32.totalorder %s20, 0
      %p76 = por %p74, %p75
      %p77 = scmp.ne.s32.totalorder %s63, %s64
      %p78 = scmp.eq.s32.totalorder %s21, 7
      %p79 = por %p77, %p78
      %p81 = scmp.ne.s32.totalorder %s64, %s80
      %p82 = scmp.eq.s32.totalorder %s21, 0
      %p83 = por %p81, %p82
      %s84 = ssub.s32 %s22, %s34
      %p85 = scmp.eq.s32.totalorder %s84, 0
      %s87 = sadd.s32 %s86, 1
      %s88 = scalar_select %p85, %s86, %s87
      %p91 = pneg %p85
      %p92 = scmp.eq.s32.totalorder %s15, 7
      %p93 = por %p91, %p92
      %p94 = scmp.ne.s32.totalorder %s86, %s89
      %p95 = scmp.eq.s32.totalorder %s15, 0
      %p96 = por %p94, %p95
      %p97 = scmp.ne.s32.totalorder %s86, %s89
      %p98 = scmp.eq.s32.totalorder %s20, 7
      %p99 = por %p97, %p98
      %p100 = scmp.ne.s32.totalorder %s89, %s90
      %p101 = scmp.eq.s32.totalorder %s20, 0
      %p102 = por %p100, %p101
      %p103 = scmp.ne.s32.totalorder %s89, %s90
      %p104 = scmp.eq.s32.totalorder %s21, 7
      %p105 = por %p103, %p104
      %p107 = scmp.ne.s32.totalorder %s90, %s106
      %p108 = scmp.eq.s32.totalorder %s21, 0
      %p109 = por %p107, %p108
      %p110 = scmp.le.s32.totalorder 1, %s15
      %p111 = scmp.lt.s32.totalorder %s15, 9
      %p112 = pnand %p110, %p111
      %p113 = pneg %p112
      // Predicated region
      $region9: #{tpu_custom_call.1} parent=5 // pred_check
        _
      $region10: #{tpu_custom_call.1} parent=5 // pred_check_branch
        %115 = sbr.rel (%p112) target = $region12
      $region11: #{tpu_custom_call.1} parent=5 // pred_region
        %s116 = ssub.s32 %s15, 1
        // Predicated region
        $region13: #{tpu_custom_call.1} parent=11 // pred_check
          %p117 = pneg %p48
        $region14: #{tpu_custom_call.1} parent=11 // pred_check_branch
          %119 = sbr.rel (%p117) target = $region16
        $region15: #{tpu_custom_call.1} parent=11 // pred_region
          %s121 = ssub.s32 256, 256
          %122 = vsyncadd [#allocation3], %s121
          %s124 = sshll.u32 [#allocation2], 4
          %s125 = int_to_ptr.vmem [resolvable:$true] %s124
          %127 = dma.hbm_to_vmem [thread:$0]  %s0, 256, %s125, [#allocation3]
        $region16: #{tpu_custom_call.1} parent=11 // pred_fallthru
          _
      $region12: #{tpu_custom_call.1} parent=5 // pred_fallthru
        _
      %p128 = scmp.lt.s32.totalorder %s15, 8
      // Predicated region
      $region17: #{tpu_custom_call.1} parent=5 // pred_check
        %p129 = pneg %p128
      $region18: #{tpu_custom_call.1} parent=5 // pred_check_branch
        %131 = sbr.rel (%p129) target = $region20
      $region19: #{tpu_custom_call.1} parent=5 // pred_region
        // Predicated region
        $region21: #{tpu_custom_call.1} parent=19 // pred_check
          %p132 = pneg %p70
        $region22: #{tpu_custom_call.1} parent=19 // pred_check_branch
          %134 = sbr.rel (%p132) target = $region24
        $region23: #{tpu_custom_call.1} parent=19 // pred_region
          %s135 = sand.u32 %s60, 1
          %s136 = scalar_lea.sflag [#allocation6], %s135
          %s137 = sand.u32 %s60, 1
          %s138 = smul.addr %s137, 64
          %s139 = scalar_lea.vmem [#allocation5], %s138
          %s140 = smul.u32 16, %s23
          %s142 = ssub.s32 1024, 1024
          %143 = vsyncadd %s136, %s142
          %s144 = smul.addr %s140, 2
          %s145 = sadd.s32 %s22, %s144
          %s146 = smul.addr %s145, 64
          %s147 = scalar_lea.hbm %s1, %s146
          %s148 = sshll.u32 %s139, 4
          %s149 = int_to_ptr.vmem [resolvable:$true] %s148
          %154 = dma.hbm_to_vmem [thread:$0]  %s147, 1024, %s149, %s136, 128, 64, 4
        $region24: #{tpu_custom_call.1} parent=19 // pred_fallthru
          _
      $region20: #{tpu_custom_call.1} parent=5 // pred_fallthru
        _
      %p155 = scmp.le.s32.totalorder 1, %s15
      %p156 = scmp.lt.s32.totalorder %s15, 9
      %p157 = pnand %p155, %p156
      %p158 = pneg %p157
      // Predicated region
      $region25: #{tpu_custom_call.1} parent=5 // pred_check
        _
      $region26: #{tpu_custom_call.1} parent=5 // pred_check_branch
        %160 = sbr.rel (%p157) target = $region28
      $region27: #{tpu_custom_call.1} parent=5 // pred_region
        %s161 = ssub.s32 %s15, 1
        // Predicated region
        $region29: #{tpu_custom_call.1} parent=27 // pred_check
          %p162 = pneg %p48
        $region30: #{tpu_custom_call.1} parent=27 // pred_check_branch
          %164 = sbr.rel (%p162) target = $region32
        $region31: #{tpu_custom_call.1} parent=27 // pred_region
          %165 = dma.done [#allocation3], 256
        $region32: #{tpu_custom_call.1} parent=27 // pred_fallthru
          _
        %s166 = sand.u32 %s63, 1
        %s167 = scalar_lea.sflag [#allocation6], %s166
        %s168 = sand.u32 %s63, 1
        %s169 = smul.addr %s168, 64
        %s170 = scalar_lea.vmem [#allocation5], %s169
        // Predicated region
        $region33: #{tpu_custom_call.1} parent=27 // pred_check
          %p171 = pneg %p76
        $region34: #{tpu_custom_call.1} parent=27 // pred_check_branch
          %173 = sbr.rel (%p171) target = $region36
        $region35: #{tpu_custom_call.1} parent=27 // pred_region
          %174 = dma.done %s167, 1024
        $region36: #{tpu_custom_call.1} parent=27 // pred_fallthru
          _
        %p175 = pneg %p48
        %p176 = pneg %p45
        %s177 = sand.u32 %s63, 1
        %s178 = scalar_lea.sflag [#allocation6], %s177
        %s179 = sand.u32 %s63, 1
        %s180 = smul.addr %s179, 64
        %s181 = scalar_lea.vmem [#allocation5], %s180
        %p182 = pneg %p76
        %p183 = pneg %p73
        %p184 = pneg %p102
        %p185 = pneg %p99
        %s186 = sand.u32 %s89, 1
        %s187 = scalar_lea.sflag [#allocation4], %s186
        %s188 = sand.u32 %s89, 1
        %s189 = smul.addr %s188, 8
        %s190 = scalar_lea.vmem [#allocation7], %s189
        %s191 = smul.u32 16, %s25
        %p193 = scmp.eq.s32.totalorder %s25, 0
        // Predicated region
        $region37: #{tpu_custom_call.1} parent=27 // pred_check
          %p194 = pneg %p193
        $region38: #{tpu_custom_call.1} parent=27 // pred_check_branch
          %196 = sbr.rel (%p194) target = $region40
        $region39: #{tpu_custom_call.1} parent=27 // pred_region
          %197 = vst [vmem:[%s190] sm:$0xff] 0.0
        $region40: #{tpu_custom_call.1} parent=27 // pred_fallthru
          _
        %s198 = smul.u32 %s25, 128
        %s199 = sshra.s32 %s198, 7
        %s200 = sand.u32 %s198, 127
        %s201 = smul.addr %s199, 4
        %s202 = scalar_lea.vmem [#allocation2], %s201
        %v203 = vld [vmem:[%s202] sm:$0xf]
        %v204 = vld [vmem:[%s190] sm:$0xff]
        %v205 = vld [vmem:[%s170] sm:$0xf]
        %v206 = vld [vmem:[%s170 + $0x4] sm:$0xf]
        %v207 = vld [vmem:[%s170 + $0x8] sm:$0xf]
        %v208 = vld [vmem:[%s170 + $0xc] sm:$0xf]
        %v209 = vld [vmem:[%s170 + $0x10] sm:$0xf]
        %v210 = vld [vmem:[%s170 + $0x14] sm:$0xf]
        %v211 = vld [vmem:[%s170 + $0x18] sm:$0xf]
        %v212 = vld [vmem:[%s170 + $0x1c] sm:$0xf]
        %v213 = vld [vmem:[%s170 + $0x20] sm:$0xf]
        %v214 = vld [vmem:[%s170 + $0x24] sm:$0xf]
        %v215 = vld [vmem:[%s170 + $0x28] sm:$0xf]
        %v216 = vld [vmem:[%s170 + $0x2c] sm:$0xf]
        %v217 = vld [vmem:[%s170 + $0x30] sm:$0xf]
        %v218 = vld [vmem:[%s170 + $0x34] sm:$0xf]
        %v219 = vld [vmem:[%s170 + $0x38] sm:$0xf]
        %v220 = vld [vmem:[%s170 + $0x3c] sm:$0xf]
        %v237 = vunpack.c.l.b16 %v205
        %v238 = vunpack.c.l.b16 %v206
        %v239 = vunpack.c.l.b16 %v207
        %v240 = vunpack.c.l.b16 %v208
        %v241 = vunpack.c.l.b16 %v209
        %v242 = vunpack.c.l.b16 %v210
        %v243 = vunpack.c.l.b16 %v211
        %v244 = vunpack.c.l.b16 %v212
        %v245 = vunpack.c.l.b16 %v213
        %v246 = vunpack.c.l.b16 %v214
        %v247 = vunpack.c.l.b16 %v215
        %v248 = vunpack.c.l.b16 %v216
        %v249 = vunpack.c.l.b16 %v217
        %v250 = vunpack.c.l.b16 %v218
        %v251 = vunpack.c.l.b16 %v219
        %v252 = vunpack.c.l.b16 %v220
        %v253 = vpack.c.b16 %v238, %v237
        %v254 = vpack.c.b16 %v240, %v239
        %v255 = vpack.c.b16 %v242, %v241
        %v256 = vpack.c.b16 %v244, %v243
        %v257 = vpack.c.b16 %v246, %v245
        %v258 = vpack.c.b16 %v248, %v247
        %v259 = vpack.c.b16 %v250, %v249
        %v260 = vpack.c.b16 %v252, %v251
        %269 = vmatprep.subr.bf16.mxu0 0
        %270 = vmatpush1.bf16.msra.mxu0 %v253
        %271 = vmatprep.subr.bf16.mxu0 0
        %272 = vmatpush1.bf16.msra.mxu0 %v254
        %273 = vmatprep.subr.bf16.mxu0 0
        %274 = vmatpush1.bf16.msra.mxu0 %v255
        %275 = vmatprep.subr.bf16.mxu0 0
        %276 = vmatpush1.bf16.msra.mxu0 %v256
        %277 = vmatprep.subr.bf16.mxu0 0
        %278 = vmatpush1.bf16.msra.mxu0 %v257
        %279 = vmatprep.subr.bf16.mxu0 0
        %280 = vmatpush1.bf16.msra.mxu0 %v258
        %281 = vmatprep.subr.bf16.mxu0 0
        %282 = vmatpush1.bf16.msra.mxu0 %v259
        %283 = vmatprep.subr.bf16.mxu0 0
        %284 = vmatpush1.bf16.msra.mxu0 %v260
        %285 = vmatprep.subr.bf16.mxu0 0
        %286 = vmatpush1.bf16.msra.mxu0 0
        %287 = vmatprep.subr.bf16.mxu0 0
        %288 = vmatpush1.bf16.msra.mxu0 0
        %289 = vmatprep.subr.bf16.mxu0 0
        %290 = vmatpush1.bf16.msra.mxu0 0
        %291 = vmatprep.subr.bf16.mxu0 0
        %292 = vmatpush1.bf16.msra.mxu0 0
        %293 = vmatprep.subr.bf16.mxu0 0
        %294 = vmatpush1.bf16.msra.mxu0 0
        %295 = vmatprep.subr.bf16.mxu0 0
        %296 = vmatpush1.bf16.msra.mxu0 0
        %297 = vmatprep.subr.bf16.mxu0 0
        %298 = vmatpush1.bf16.msra.mxu0 0
        %299 = vmatprep.subr.bf16.mxu0 0
        %300 = vmatpush1.bf16.msra.mxu0 0
        %301 = vmatprep.mubr.bf16.mxu0 0
        %302 = vmatmul.mubr.bf16.gmra.mrb[0].mxu0 %v203
        %v303 = vpop.f32.mrb[0].mxu0
        %v304 = vadd.f32 0.0, %v303
        %v305 = vpop.f32.mrb[0].mxu0
        %v306 = vpop.f32.mrb[0].mxu0
        %v307 = vpop.f32.mrb[0].mxu0
        %308 = vdwg.mxu0
        %v309 = vadd.f32 %v204, %v304
        %310 = vst [vmem:[%s190] sm:$0xff] %v309
        %s311 = sand.u32 %s89, 1
        %s312 = scalar_lea.sflag [#allocation4], %s311
        %s313 = sand.u32 %s89, 1
        %s314 = smul.addr %s313, 8
        %s315 = scalar_lea.vmem [#allocation7], %s314
        // Predicated region
        $region41: #{tpu_custom_call.1} parent=27 // pred_check
          %p316 = pneg %p99
        $region42: #{tpu_custom_call.1} parent=27 // pred_check_branch
          %318 = sbr.rel (%p316) target = $region44
        $region43: #{tpu_custom_call.1} parent=27 // pred_region
          %s320 = ssub.s32 128, 128
          %321 = vsyncadd %s312, %s320
          %s322 = smul.addr %s24, 128
          %s323 = scalar_lea.hbm %s2, %s322
          %s325 = sshll.u32 %s315, 4
          %s326 = int_to_ptr.vmem [resolvable:$true] %s325
          %328 = dma.vmem_to_hbm [thread:$0]  %s326, 128, %s323, %s312
        $region44: #{tpu_custom_call.1} parent=27 // pred_fallthru
          _
      $region28: #{tpu_custom_call.1} parent=5 // pred_fallthru
        _
      %p329 = scmp.le.s32.totalorder 2, %s15
      // Predicated region
      $region45: #{tpu_custom_call.1} parent=5 // pred_check
        %p330 = pneg %p329
      $region46: #{tpu_custom_call.1} parent=5 // pred_check_branch
        %332 = sbr.rel (%p330) target = $region48
      $region47: #{tpu_custom_call.1} parent=5 // pred_region
        %s333 = ssub.s32 %s15, 2
        // Predicated region
        $region49: #{tpu_custom_call.1} parent=47 // pred_check
          %p334 = pneg %p105
        $region50: #{tpu_custom_call.1} parent=47 // pred_check_branch
          %336 = sbr.rel (%p334) target = $region52
        $region51: #{tpu_custom_call.1} parent=47 // pred_region
          %s337 = sand.u32 %s90, 1
          %s338 = scalar_lea.sflag [#allocation4], %s337
          %s339 = sand.u32 %s90, 1
          %s340 = smul.addr %s339, 8
          %s341 = scalar_lea.vmem [#allocation7], %s340
          %342 = dma.done %s338, 128
        $region52: #{tpu_custom_call.1} parent=47 // pred_fallthru
          _
      $region48: #{tpu_custom_call.1} parent=5 // pred_fallthru
        _
    $region6: #{tpu_custom_call.1} parent=1 // loop_footer
      %s19 = sadd.s32 1, %s15
    $region7: #{tpu_custom_call.1} parent=1 // loop_footer_branch
      %14 = sbr.rel target = $region3
    $region8: #{tpu_custom_call.1} parent=1 // loop_exit
      _
    %343 = vsyncpa [#allocation3], 1
    %s344 = scalar_lea.sflag [#allocation3], 1
    %345 = vsyncpa %s344, 1
    %346 = vsyncpa [#allocation6], 1
    %s347 = scalar_lea.sflag [#allocation6], 1
    %348 = vsyncpa %s347, 1
    %349 = vsyncpa [#allocation4], 1
    %s350 = scalar_lea.sflag [#allocation4], 1
    %351 = vsyncpa %s350, 1

</llo_original>
